<compile_context>
chip_gen: v6e
topology: v6e:2x2x1
jax: 0.10.0
libtpu: 0.0.40
codegen_flags: <defaults>
</compile_context>

<pallas_src>
import functools

import jax
import jax.numpy as jnp
from jax.experimental import pallas as pl
from jax.experimental.pallas import tpu as pltpu

_LANE = 128
_SUBLANE = 8
_NEG_INF = -1e30      # finite "-inf": exp() underflows to exactly 0 in f32
_TB_CAP = 512         # pipelined throughput saturates ~here; keeps (TB, 2*Hp) interm. small
_MIB = 1 << 20


def _round_up(n, m):
    return ((n + m - 1) // m) * m


def _cdiv(a, b):
    return -(-a // b)


def _vmem_bytes():
    try:
        v = int(pltpu.get_tpu_info().vmem_capacity_bytes)
        if v > 0:
            return v
    except Exception:
        pass
    return 64 * _MIB  # conservative default (v7x per-TensorCore VMEM)


def _pad2(a, shape, fill=0.0):
    out = jnp.full(shape, fill, a.dtype)
    return out.at[: a.shape[0], : a.shape[1]].set(a)


# ---------------------------------------------------------------------------
# Kernels
# ---------------------------------------------------------------------------

def _resident_kernel(x_ref, w1_ref, b1_ref, w2_ref, b2_ref, out_ref, *,
                     glu_on: bool, hidden_p: int):
    """All weights VMEM-resident; [w1 | wg] fused into a single (D, 2*Hp) matmul."""
    x = x_ref[...]                                                   # (TB, D) bf16
    h = jnp.dot(x, w1_ref[...], preferred_element_type=jnp.float32) + b1_ref[...]

    if glu_on:
        h1 = h[:, :hidden_p]                                         # lane-aligned split
        g = h[:, hidden_p:]
        gate = pl.reciprocal(1.0 + jnp.exp(-g), approx=True)         # sigmoid on EUP slot
        h1 = h1 * gate
    else:
        h1 = h

    h1 = jnp.maximum(h1, 0.0)                                        # ReLU (f32)

    logits = jnp.dot(h1.astype(w2_ref.dtype), w2_ref[...],
                     preferred_element_type=jnp.float32) + b2_ref[...]

    # Softmax over experts; padded experts carry a -1e30 bias -> exactly 0 probability.
    m = jnp.max(logits, axis=-1, keepdims=True)
    e = jnp.exp(logits - m)
    out_ref[...] = (e / jnp.sum(e, axis=-1, keepdims=True)).astype(out_ref.dtype)


def _tiled_kernel(*refs, glu_on: bool):
    """Fallback: hidden dim tiled over grid axis 1, logits accumulated in VMEM scratch."""
    if glu_on:
        (x_ref, w1_ref, b1_ref, wg_ref, bg_ref, w2_ref, b2_ref, out_ref, acc_ref) = refs
    else:
        (x_ref, w1_ref, b1_ref, w2_ref, b2_ref, out_ref, acc_ref) = refs

    j = pl.program_id(1)

    @pl.when(j == 0)
    def _():
        acc_ref[...] = jnp.zeros_like(acc_ref)

    x = x_ref[...]                                                   # (TB, D) bf16
    h = jnp.dot(x, w1_ref[...], preferred_element_type=jnp.float32) + b1_ref[...]
    if glu_on:
        g = jnp.dot(x, wg_ref[...], preferred_element_type=jnp.float32) + bg_ref[...]
        h = h * pl.reciprocal(1.0 + jnp.exp(-g), approx=True)
    h = jnp.maximum(h, 0.0)

    acc_ref[...] += jnp.dot(h.astype(w2_ref.dtype), w2_ref[...],
                            preferred_element_type=jnp.float32)

    @pl.when(j == pl.num_programs(1) - 1)
    def _():
        logits = acc_ref[...] + b2_ref[...]
        m = jnp.max(logits, axis=-1, keepdims=True)
        e = jnp.exp(logits - m)
        out_ref[...] = (e / jnp.sum(e, axis=-1, keepdims=True)).astype(out_ref.dtype)


# ---------------------------------------------------------------------------
# Tiling helpers
# ---------------------------------------------------------------------------

def _batch_tiling(B, per_row_bytes, resident_bytes, vmem_budget):
    """Pick (TB, steps, Bp): TB <= 512, multiple of 8/16, that (nearly) divides the
    padded batch, fits the VMEM budget, and gives >=2 grid steps when the batch allows
    (so v7x megacore can shard the parallel batch axis)."""
    Bp8 = _round_up(max(B, 1), _SUBLANE)
    avail = max(vmem_budget - resident_bytes, 2 * _MIB)
    best = None
    for mult in (16, 8):   # prefer 16 (bf16 sublane packing) unless 8 pads strictly less
        if Bp8 < mult:
            continue
        cap = min(max(avail // max(per_row_bytes, 1), mult), _TB_CAP, Bp8)
        cap = max(mult, (cap // mult) * mult)
        steps = _cdiv(Bp8, cap)
        if steps == 1 and Bp8 >= 2 * mult:
            steps = 2
        tb = _round_up(_cdiv(Bp8, steps), mult)
        steps = _cdiv(Bp8, tb)
        cand = (tb * steps, tb, steps)
        if best is None or cand[0] < best[0]:
            best = cand
    bp, tb, steps = best
    return tb, steps, bp


# ---------------------------------------------------------------------------
# Forward paths
# ---------------------------------------------------------------------------

def _forward_resident(x, params, glu_on, budget, phys_vmem):
    B, D = x.shape
    hidden = params["w1"].shape[1]
    E = params["w2"].shape[1]
    Hp = _round_up(hidden, _LANE)
    Ep = _round_up(E, _LANE)

    # Pad / pack weights in the wrapper (one-time cost, keeps the kernel lane-dense).
    w1 = _pad2(params["w1"], (D, Hp)).astype(jnp.bfloat16)
    b1 = _pad2(params["b1"].reshape(1, -1), (1, Hp))                     # f32
    w2 = _pad2(params["w2"], (Hp, Ep)).astype(jnp.bfloat16)
    b2 = _pad2(params["b2"].reshape(1, -1), (1, Ep), fill=_NEG_INF)      # f32

    if glu_on:
        wg = _pad2(params["wg"], (D, Hp)).astype(jnp.bfloat16)
        bg = _pad2(params["bg"].reshape(1, -1), (1, Hp))
        w1f = jnp.concatenate([w1, wg], axis=1)                          # (D, 2*Hp)
        b1f = jnp.concatenate([b1, bg], axis=1)
    else:
        w1f, b1f = w1, b1                                                # no wasted DMA
    Wf = w1f.shape[1]

    # VMEM accounting: weights (worst case 2 buffers) + streamed x/out + f32 intermediates.
    resident_bytes = 2 * (D * Wf + Hp * Ep) * 2 + (Wf + Ep) * 4
    per_row = 2 * D * 2 + 2 * Ep * 4 + (Wf + 2 * Hp + Ep) * 4
    TB, steps, Bp = _batch_tiling(B, per_row, resident_bytes, budget)

    xp = x.astype(jnp.bfloat16)
    if Bp != B:
        xp = _pad2(xp, (Bp, D))

    needed = resident_bytes + TB * per_row + 4 * _MIB
    vmem_limit = int(min(phys_vmem, max(32 * _MIB, 2 * needed)))

    flops = 2 * Bp * (D * Wf + Hp * Ep)
    transcend = Bp * ((Hp if glu_on else 0) + Ep)
    bytes_acc = 2 * (Bp * D + D * Wf + Hp * Ep) + 4 * (Wf + Ep + Bp * Ep)

    kernel = functools.partial(_resident_kernel, glu_on=glu_on, hidden_p=Hp)

    def call(single_buffer_weights):
        if single_buffer_weights:
            wspec = lambda a: pl.BlockSpec(a.shape, lambda i: (0, 0),
                                           pipeline_mode=pl.Buffered(1))
        else:
            wspec = lambda a: pl.BlockSpec(a.shape, lambda i: (0, 0))
        return pl.pallas_call(
            kernel,
            out_shape=jax.ShapeDtypeStruct((Bp, Ep), jnp.float32),
            grid=(Bp // TB,),
            in_specs=[
                pl.BlockSpec((TB, D), lambda i: (i, 0)),     # x: pipelined batch tiles
                wspec(w1f), wspec(b1f), wspec(w2), wspec(b2),
            ],
            out_specs=pl.BlockSpec((TB, Ep), lambda i: (i, 0)),   # lane-dense (Ep = 128k)
            compiler_params=pltpu.CompilerParams(
                dimension_semantics=("parallel",),
                vmem_limit_bytes=vmem_limit),
            cost_estimate=pl.CostEstimate(
                flops=flops, transcendentals=transcend, bytes_accessed=bytes_acc),
        )(xp, w1f, b1f, w2, b2)

    try:
        out_p = call(True)     # weights single-buffered: constant index_map needs no 2nd copy
    except Exception:
        out_p = call(False)    # pl.Buffered(1) unsupported by this jax/Mosaic -> default

    return out_p[:B, :E]


def _forward_tiled(x, params, glu_on, hidden_tile, budget, phys_vmem):
    """Weights do not fit VMEM: stream hidden-dim tiles and accumulate logits in VMEM."""
    B, D = x.shape
    hidden = params["w1"].shape[1]
    E = params["w2"].shape[1]
    Ep = _round_up(E, _LANE)
    Hp0 = _round_up(hidden, _LANE)

    if hidden_tile is not None:
        TH = _round_up(int(hidden_tile), _LANE)
    else:
        per_col = (D * (2 if glu_on else 1) + Ep) * 2 * 2    # bf16, double-buffered
        TH = max(_LANE, ((budget // 2) // max(per_col, 1)) // _LANE * _LANE)
    TH = min(TH, Hp0)
    n_h = _cdiv(Hp0, TH)
    Hp = TH * n_h                                            # pad hidden so TH divides it

    w1 = _pad2(params["w1"], (D, Hp)).astype(jnp.bfloat16)
    b1 = _pad2(params["b1"].reshape(1, -1), (1, Hp))
    w2 = _pad2(params["w2"], (Hp, Ep)).astype(jnp.bfloat16)
    b2 = _pad2(params["b2"].reshape(1, -1), (1, Ep), fill=_NEG_INF)

    weights = [w1, b1]
    if glu_on:
        wg = _pad2(params["wg"], (D, Hp)).astype(jnp.bfloat16)
        bg = _pad2(params["bg"].reshape(1, -1), (1, Hp))
        weights += [wg, bg]
    weights += [w2, b2]

    nw = 2 if glu_on else 1
    step_w_bytes = 2 * (D * TH * nw + TH * Ep) * 2 + (TH + Ep) * 4       # double-buffered
    per_row = 2 * D * 2 + 2 * Ep * 4 + (nw * TH + 2 * Ep) * 4
    TB, bsteps, Bp = _batch_tiling(B, per_row, step_w_bytes, budget)

    xp = x.astype(jnp.bfloat16)
    if Bp != B:
        xp = _pad2(xp, (Bp, D))

    needed = step_w_bytes + TB * per_row + 4 * _MIB
    vmem_limit = int(min(phys_vmem, max(32 * _MIB, 2 * needed)))

    flops = 2 * Bp * (D * Hp * nw + Hp * Ep)
    transcend = Bp * ((Hp if glu_on else 0) + Ep)
    bytes_acc = 2 * (Bp * D + D * Hp * nw + Hp * Ep) + 4 * (Hp + Ep + Bp * Ep)

    in_specs = [pl.BlockSpec((TB, D), lambda i, j: (i, 0))]              # x per batch tile
    in_specs += [pl.BlockSpec((D, TH), lambda i, j: (0, j)),             # w1 tile
                 pl.BlockSpec((1, TH), lambda i, j: (0, j))]             # b1 tile
    if glu_on:
        in_specs += [pl.BlockSpec((D, TH), lambda i, j: (0, j)),         # wg tile
                     pl.BlockSpec((1, TH), lambda i, j: (0, j))]         # bg tile
    in_specs += [pl.BlockSpec((TH, Ep), lambda i, j: (j, 0)),            # w2 tile
                 pl.BlockSpec((1, Ep), lambda i, j: (0, 0))]             # b2

    out_p = pl.pallas_call(
        functools.partial(_tiled_kernel, glu_on=glu_on),
        out_shape=jax.ShapeDtypeStruct((Bp, Ep), jnp.float32),
        grid=(Bp // TB, n_h),
        in_specs=in_specs,
        out_specs=pl.BlockSpec((TB, Ep), lambda i, j: (i, 0)),
        scratch_shapes=[pltpu.VMEM((TB, Ep), jnp.float32)],
        compiler_params=pltpu.CompilerParams(
            dimension_semantics=("parallel", "arbitrary"),
            vmem_limit_bytes=vmem_limit),
        cost_estimate=pl.CostEstimate(
            flops=flops, transcendentals=transcend, bytes_accessed=bytes_acc),
    )(xp, *weights)

    return out_p[:B, :E]


def router_with_glu(x, params, glu_on: bool = True, *, hidden_tile=None):
    """x: [B, input_dim].  params: dict of pre-transposed (in, out) weights/biases.

    bf16 matmuls with f32 accumulation; bias-add / GLU / softmax in f32. Probabilities
    use an exact divide and sum to 1; the sigmoid gate uses the approx EUP reciprocal.
    """
    x = x.astype(jnp.float32)
    B, D = x.shape
    hidden = params["w1"].shape[1]
    E = params["w2"].shape[1]
    Ep = _round_up(E, _LANE)
    Hp0 = _round_up(hidden, _LANE)

    phys_vmem = _vmem_bytes()
    budget = int(phys_vmem * 0.7)

    # Guard: if resident bf16 weights (worst case double-buffered) exceed ~half the
    # budget (bites on v7x's 64 MiB), switch to the hidden-tiled accumulator kernel.
    wf0 = 2 * Hp0 if glu_on else Hp0
    resident_w = 2 * (D * wf0 + Hp0 * Ep) * 2
    use_tiled = hidden_tile is not None or resident_w > budget // 2

    if use_tiled:
        return _forward_tiled(x, params, glu_on, hidden_tile, budget, phys_vmem)
    return _forward_resident(x, params, glu_on, budget, phys_vmem)


# ---------------------------------------------------------------------------
# Init + reference + test
# ---------------------------------------------------------------------------

def init_params(key, input_dim, hidden_dim, num_experts):
    """Deterministic synthetic init mirroring nn.Linear shapes.
    PyTorch Linear stores weight as (out, in); we pre-transpose to (in, out)."""
    ks = jax.random.split(key, 6)

    def lin(kw, kb, fan_in, fan_out):
        bound = 1.0 / jnp.sqrt(fan_in)
        w = jax.random.uniform(kw, (fan_in, fan_out), jnp.float32, -bound, bound)
        b = jax.random.uniform(kb, (1, fan_out), jnp.float32, -bound, bound)
        return w, b

    w1, b1 = lin(ks[0], ks[1], input_dim, hidden_dim)
    wg, bg = lin(ks[2], ks[3], input_dim, hidden_dim)
    w2, b2 = lin(ks[4], ks[5], hidden_dim, num_experts)
    return {"w1": w1, "b1": b1, "wg": wg, "bg": bg, "w2": w2, "b2": b2}


def _reference(x, p, glu_on=True):
    h1 = x @ p["w1"] + p["b1"]
    if glu_on:
        h1 = h1 * jax.nn.sigmoid(x @ p["wg"] + p["bg"])
    h1 = jax.nn.relu(h1)
    return jax.nn.softmax(h1 @ p["w2"] + p["b2"], axis=-1)


if __name__ == "__main__":
    key = jax.random.PRNGKey(0)
    k_x, k_p, k_p2 = jax.random.split(key, 3)

    batch, input_dim, hidden_dim, num_experts = 8, 32, 64, 8
    x = jax.random.normal(k_x, (batch, input_dim), jnp.float32)
    params = init_params(k_p, input_dim, hidden_dim, num_experts)

    # --- primary (VMEM-resident weights) path, GLU on ---
    out = jax.block_until_ready(router_with_glu(x, params, glu_on=True))
    ref = _reference(x, params, glu_on=True)
    assert out.shape == (batch, num_experts)
    # bf16 MXU inputs + approx sigmoid reciprocal -> relaxed tolerance vs. f32 reference
    assert jnp.allclose(out, ref, atol=5e-3, rtol=5e-3), float(jnp.max(jnp.abs(out - ref)))
    assert jnp.allclose(jnp.sum(out, axis=-1), 1.0, atol=1e-4)   # exact softmax divide

    # --- primary path, GLU off (no wg/bg arguments are passed to the kernel at all) ---
    out_ng = jax.block_until_ready(router_with_glu(x, params, glu_on=False))
    ref_ng = _reference(x, params, glu_on=False)
    assert jnp.allclose(out_ng, ref_ng, atol=5e-3, rtol=5e-3)

    # --- hidden-tiled fallback path (forced), exercising the accumulator grid axis ---
    params_big = init_params(k_p2, input_dim, 256, num_experts)
    out_t = jax.block_until_ready(
        router_with_glu(x, params_big, glu_on=True, hidden_tile=128))
    ref_t = _reference(x, params_big, glu_on=True)
    assert jnp.allclose(out_t, ref_t, atol=5e-3, rtol=5e-3), \
        float(jnp.max(jnp.abs(out_t - ref_t)))

    out_t0 = jax.block_until_ready(
        router_with_glu(x, params_big, glu_on=False, hidden_tile=128))
    ref_t0 = _reference(x, params_big, glu_on=False)
    assert jnp.allclose(out_t0, ref_t0, atol=5e-3, rtol=5e-3)

    print("KERNEL_OK")
</pallas_src>

<mosaic_0001>
module attributes {stable_mosaic.version = 11 : i64} {
  func.func @_resident_kernel(%arg0: i32, %arg1: memref<8x32xbf16, #tpu.memory_space<vmem>>, %arg2: memref<32x256xbf16, #tpu.memory_space<vmem>>, %arg3: memref<1x256xf32, #tpu.memory_space<vmem>>, %arg4: memref<128x128xbf16, #tpu.memory_space<vmem>>, %arg5: memref<1x128xf32, #tpu.memory_space<vmem>>, %arg6: memref<8x128xf32, #tpu.memory_space<vmem>>) attributes {dimension_semantics = [#tpu.dimension_semantics<parallel>], iteration_bounds = array<i64: 1>, scalar_prefetch = 0 : i64, scratch_operands = 0 : i64, tpu.core_type = #tpu.core_type<tc>, window_params = [{transform_indices = @transform_0, window_bounds = array<i64: 8, 32>}, {pipeline_mode = #tpu.pipeline_mode<synchronous>, transform_indices = @transform_1, window_bounds = array<i64: 32, 256>}, {pipeline_mode = #tpu.pipeline_mode<synchronous>, transform_indices = @transform_2, window_bounds = array<i64: 1, 256>}, {pipeline_mode = #tpu.pipeline_mode<synchronous>, transform_indices = @transform_3, window_bounds = array<i64: 128, 128>}, {pipeline_mode = #tpu.pipeline_mode<synchronous>, transform_indices = @transform_4, window_bounds = array<i64: 1, 128>}, {transform_indices = @transform_5, window_bounds = array<i64: 8, 128>}]} {
    %c0 = arith.constant 0 : index
    %c0_0 = arith.constant 0 : index
    %0 = vector.load %arg1[%c0, %c0_0] : memref<8x32xbf16, #tpu.memory_space<vmem>>, vector<8x32xbf16>
    %c0_1 = arith.constant 0 : index
    %c0_2 = arith.constant 0 : index
    %1 = vector.load %arg2[%c0_1, %c0_2] : memref<32x256xbf16, #tpu.memory_space<vmem>>, vector<32x256xbf16>
    %cst = arith.constant dense<0.000000e+00> : vector<8x256xf32>
    %2 = tpu.matmul %0, %1, %cst {dimension_numbers = #tpu.dot_dimension_numbers<[1], [0], [0], [1], [0, 0, 1, 1], [], []>} : vector<8x32xbf16>, vector<32x256xbf16>, vector<8x256xf32> -> vector<8x256xf32>
    %c0_3 = arith.constant 0 : index
    %c0_4 = arith.constant 0 : index
    %3 = vector.load %arg3[%c0_3, %c0_4] : memref<1x256xf32, #tpu.memory_space<vmem>>, vector<1x256xf32>
    %4 = vector.broadcast %3 : vector<1x256xf32> to vector<8x256xf32>
    %5 = arith.addf %2, %4 : vector<8x256xf32>
    %6 = vector.extract_strided_slice %5 {offsets = [0, 0], sizes = [8, 128], strides = [1, 1]} : vector<8x256xf32> to vector<8x128xf32>
    %7 = vector.extract_strided_slice %5 {offsets = [0, 128], sizes = [8, 128], strides = [1, 1]} : vector<8x256xf32> to vector<8x128xf32>
    %cst_5 = arith.constant 0.000000e+00 : f32
    %8 = vector.broadcast %cst_5 : f32 to vector<8x128xf32>
    %9 = arith.subf %8, %7 : vector<8x128xf32>
    %10 = math.exp %9 : vector<8x128xf32>
    %cst_6 = arith.constant 1.000000e+00 : f32
    %11 = vector.broadcast %cst_6 : f32 to vector<8x128xf32>
    %12 = arith.addf %11, %10 : vector<8x128xf32>
    %13 = tpu.reciprocal %12 {approx = true} : vector<8x128xf32> -> vector<8x128xf32>
    %14 = arith.mulf %6, %13 : vector<8x128xf32>
    %cst_7 = arith.constant 0.000000e+00 : f32
    %15 = vector.broadcast %cst_7 : f32 to vector<8x128xf32>
    %16 = arith.maximumf %14, %15 : vector<8x128xf32>
    %17 = arith.truncf %16 : vector<8x128xf32> to vector<8x128xbf16>
    %c0_8 = arith.constant 0 : index
    %c0_9 = arith.constant 0 : index
    %18 = vector.load %arg4[%c0_8, %c0_9] : memref<128x128xbf16, #tpu.memory_space<vmem>>, vector<128x128xbf16>
    %cst_10 = arith.constant dense<0.000000e+00> : vector<8x128xf32>
    %19 = tpu.matmul %17, %18, %cst_10 {dimension_numbers = #tpu.dot_dimension_numbers<[1], [0], [0], [1], [0, 0, 1, 1], [], []>} : vector<8x128xbf16>, vector<128x128xbf16>, vector<8x128xf32> -> vector<8x128xf32>
    %c0_11 = arith.constant 0 : index
    %c0_12 = arith.constant 0 : index
    %20 = vector.load %arg5[%c0_11, %c0_12] : memref<1x128xf32, #tpu.memory_space<vmem>>, vector<1x128xf32>
    %21 = vector.broadcast %20 : vector<1x128xf32> to vector<8x128xf32>
    %22 = arith.addf %19, %21 : vector<8x128xf32>
    %cst_13 = arith.constant dense<0xFF800000> : vector<8xf32>
    %23 = vector.multi_reduction <maximumf>, %22, %cst_13 [1] : vector<8x128xf32> to vector<8xf32>
    %24 = vector.shape_cast %23 : vector<8xf32> to vector<8x1xf32>
    %25 = vector.broadcast %24 : vector<8x1xf32> to vector<8x128xf32>
    %26 = arith.subf %22, %25 : vector<8x128xf32>
    %27 = math.exp %26 : vector<8x128xf32>
    %cst_14 = arith.constant dense<0.000000e+00> : vector<8xf32>
    %28 = vector.multi_reduction <add>, %27, %cst_14 [1] : vector<8x128xf32> to vector<8xf32>
    %29 = vector.shape_cast %28 : vector<8xf32> to vector<8x1xf32>
    %30 = vector.broadcast %29 : vector<8x1xf32> to vector<8x128xf32>
    %31 = arith.divf %27, %30 : vector<8x128xf32>
    %c0_15 = arith.constant 0 : index
    %c0_16 = arith.constant 0 : index
    %32 = vector.load %arg6[%c0_15, %c0_16] : memref<8x128xf32, #tpu.memory_space<vmem>>, vector<8x128xf32>
    tpu.vector_store %arg6[%c0_15, %c0_16], %31 {strides = array<i32>} : memref<8x128xf32, #tpu.memory_space<vmem>>, vector<8x128xf32>,
    return
  }
  func.func @transform_0(%arg0: i32) -> (i32, i32) {
    %c0_i32 = arith.constant 0 : i32
    %c0_i32_0 = arith.constant 0 : i32
    return %arg0, %c0_i32 : i32, i32
  }
  func.func @transform_1(%arg0: i32) -> (i32, i32) {
    %c0_i32 = arith.constant 0 : i32
    %c0_i32_0 = arith.constant 0 : i32
    %c0_i32_1 = arith.constant 0 : i32
    return %c0_i32, %c0_i32_0 : i32, i32
  }
  func.func @transform_2(%arg0: i32) -> (i32, i32) {
    %c0_i32 = arith.constant 0 : i32
    %c0_i32_0 = arith.constant 0 : i32
    %c0_i32_1 = arith.constant 0 : i32
    return %c0_i32, %c0_i32_0 : i32, i32
  }
  func.func @transform_3(%arg0: i32) -> (i32, i32) {
    %c0_i32 = arith.constant 0 : i32
    %c0_i32_0 = arith.constant 0 : i32
    %c0_i32_1 = arith.constant 0 : i32
    return %c0_i32, %c0_i32_0 : i32, i32
  }
  func.func @transform_4(%arg0: i32) -> (i32, i32) {
    %c0_i32 = arith.constant 0 : i32
    %c0_i32_0 = arith.constant 0 : i32
    %c0_i32_1 = arith.constant 0 : i32
    return %c0_i32, %c0_i32_0 : i32, i32
  }
  func.func @transform_5(%arg0: i32) -> (i32, i32) {
    %c0_i32 = arith.constant 0 : i32
    %c0_i32_0 = arith.constant 0 : i32
    return %arg0, %c0_i32 : i32, i32
  }
}

module attributes {stable_mosaic.version = 11 : i64} {
  func.func @_resident_kernel(%arg0: i32, %arg1: memref<8x32xbf16, #tpu.memory_space<vmem>>, %arg2: memref<32x256xbf16, #tpu.memory_space<vmem>>, %arg3: memref<1x256xf32, #tpu.memory_space<vmem>>, %arg4: memref<128x128xbf16, #tpu.memory_space<vmem>>, %arg5: memref<1x128xf32, #tpu.memory_space<vmem>>, %arg6: memref<8x128xf32, #tpu.memory_space<vmem>>) attributes {dimension_semantics = [#tpu.dimension_semantics<parallel>], iteration_bounds = array<i64: 1>, scalar_prefetch = 0 : i64, scratch_operands = 0 : i64, tpu.core_type = #tpu.core_type<tc>, window_params = [{transform_indices = @transform_0, window_bounds = array<i64: 8, 32>}, {pipeline_mode = #tpu.pipeline_mode<synchronous>, transform_indices = @transform_1, window_bounds = array<i64: 32, 256>}, {pipeline_mode = #tpu.pipeline_mode<synchronous>, transform_indices = @transform_2, window_bounds = array<i64: 1, 256>}, {pipeline_mode = #tpu.pipeline_mode<synchronous>, transform_indices = @transform_3, window_bounds = array<i64: 128, 128>}, {pipeline_mode = #tpu.pipeline_mode<synchronous>, transform_indices = @transform_4, window_bounds = array<i64: 1, 128>}, {transform_indices = @transform_5, window_bounds = array<i64: 8, 128>}]} {
    %c0 = arith.constant 0 : index
    %c0_0 = arith.constant 0 : index
    %0 = vector.load %arg1[%c0, %c0_0] : memref<8x32xbf16, #tpu.memory_space<vmem>>, vector<8x32xbf16>
    %c0_1 = arith.constant 0 : index
    %c0_2 = arith.constant 0 : index
    %1 = vector.load %arg2[%c0_1, %c0_2] : memref<32x256xbf16, #tpu.memory_space<vmem>>, vector<32x256xbf16>
    %cst = arith.constant dense<0.000000e+00> : vector<8x256xf32>
    %2 = tpu.matmul %0, %1, %cst {dimension_numbers = #tpu.dot_dimension_numbers<[1], [0], [0], [1], [0, 0, 1, 1], [], []>} : vector<8x32xbf16>, vector<32x256xbf16>, vector<8x256xf32> -> vector<8x256xf32>
    %c0_3 = arith.constant 0 : index
    %c0_4 = arith.constant 0 : index
    %3 = vector.load %arg3[%c0_3, %c0_4] : memref<1x256xf32, #tpu.memory_space<vmem>>, vector<1x256xf32>
    %4 = vector.broadcast %3 : vector<1x256xf32> to vector<8x256xf32>
    %5 = arith.addf %2, %4 : vector<8x256xf32>
    %6 = vector.extract_strided_slice %5 {offsets = [0, 0], sizes = [8, 128], strides = [1, 1]} : vector<8x256xf32> to vector<8x128xf32>
    %7 = vector.extract_strided_slice %5 {offsets = [0, 128], sizes = [8, 128], strides = [1, 1]} : vector<8x256xf32> to vector<8x128xf32>
    %cst_5 = arith.constant 0.000000e+00 : f32
    %8 = vector.broadcast %cst_5 : f32 to vector<8x128xf32>
    %9 = arith.subf %8, %7 : vector<8x128xf32>
    %10 = math.exp %9 : vector<8x128xf32>
    %cst_6 = arith.constant 1.000000e+00 : f32
    %11 = vector.broadcast %cst_6 : f32 to vector<8x128xf32>
    %12 = arith.addf %11, %10 : vector<8x128xf32>
    %13 = tpu.reciprocal %12 {approx = true} : vector<8x128xf32> -> vector<8x128xf32>
    %14 = arith.mulf %6, %13 : vector<8x128xf32>
    %cst_7 = arith.constant 0.000000e+00 : f32
    %15 = vector.broadcast %cst_7 : f32 to vector<8x128xf32>
    %16 = arith.maximumf %14, %15 : vector<8x128xf32>
    %17 = arith.truncf %16 : vector<8x128xf32> to vector<8x128xbf16>
    %c0_8 = arith.constant 0 : index
    %c0_9 = arith.constant 0 : index
    %18 = vector.load %arg4[%c0_8, %c0_9] : memref<128x128xbf16, #tpu.memory_space<vmem>>, vector<128x128xbf16>
    %cst_10 = arith.constant dense<0.000000e+00> : vector<8x128xf32>
    %19 = tpu.matmul %17, %18, %cst_10 {dimension_numbers = #tpu.dot_dimension_numbers<[1], [0], [0], [1], [0, 0, 1, 1], [], []>} : vector<8x128xbf16>, vector<128x128xbf16>, vector<8x128xf32> -> vector<8x128xf32>
    %c0_11 = arith.constant 0 : index
    %c0_12 = arith.constant 0 : index
    %20 = vector.load %arg5[%c0_11, %c0_12] : memref<1x128xf32, #tpu.memory_space<vmem>>, vector<1x128xf32>
    %21 = vector.broadcast %20 : vector<1x128xf32> to vector<8x128xf32>
    %22 = arith.addf %19, %21 : vector<8x128xf32>
    %cst_13 = arith.constant dense<0xFF800000> : vector<8xf32>
    %23 = vector.multi_reduction <maximumf>, %22, %cst_13 [1] : vector<8x128xf32> to vector<8xf32>
    %24 = vector.shape_cast %23 : vector<8xf32> to vector<8x1xf32>
    %25 = vector.broadcast %24 : vector<8x1xf32> to vector<8x128xf32>
    %26 = arith.subf %22, %25 : vector<8x128xf32>
    %27 = math.exp %26 : vector<8x128xf32>
    %cst_14 = arith.constant dense<0.000000e+00> : vector<8xf32>
    %28 = vector.multi_reduction <add>, %27, %cst_14 [1] : vector<8x128xf32> to vector<8xf32>
    %29 = vector.shape_cast %28 : vector<8xf32> to vector<8x1xf32>
    %30 = vector.broadcast %29 : vector<8x1xf32> to vector<8x128xf32>
    %31 = arith.divf %27, %30 : vector<8x128xf32>
    %c0_15 = arith.constant 0 : index
    %c0_16 = arith.constant 0 : index
    %32 = vector.load %arg6[%c0_15, %c0_16] : memref<8x128xf32, #tpu.memory_space<vmem>>, vector<8x128xf32>
    tpu.vector_store %arg6[%c0_15, %c0_16], %31 {strides = array<i32>} : memref<8x128xf32, #tpu.memory_space<vmem>>, vector<8x128xf32>,
    return
  }
  func.func @transform_0(%arg0: i32) -> (i32, i32) {
    %c0_i32 = arith.constant 0 : i32
    %c0_i32_0 = arith.constant 0 : i32
    return %arg0, %c0_i32 : i32, i32
  }
  func.func @transform_1(%arg0: i32) -> (i32, i32) {
    %c0_i32 = arith.constant 0 : i32
    %c0_i32_0 = arith.constant 0 : i32
    %c0_i32_1 = arith.constant 0 : i32
    return %c0_i32, %c0_i32_0 : i32, i32
  }
  func.func @transform_2(%arg0: i32) -> (i32, i32) {
    %c0_i32 = arith.constant 0 : i32
    %c0_i32_0 = arith.constant 0 : i32
    %c0_i32_1 = arith.constant 0 : i32
    return %c0_i32, %c0_i32_0 : i32, i32
  }
  func.func @transform_3(%arg0: i32) -> (i32, i32) {
    %c0_i32 = arith.constant 0 : i32
    %c0_i32_0 = arith.constant 0 : i32
    %c0_i32_1 = arith.constant 0 : i32
    return %c0_i32, %c0_i32_0 : i32, i32
  }
  func.func @transform_4(%arg0: i32) -> (i32, i32) {
    %c0_i32 = arith.constant 0 : i32
    %c0_i32_0 = arith.constant 0 : i32
    %c0_i32_1 = arith.constant 0 : i32
    return %c0_i32, %c0_i32_0 : i32, i32
  }
  func.func @transform_5(%arg0: i32) -> (i32, i32) {
    %c0_i32 = arith.constant 0 : i32
    %c0_i32_0 = arith.constant 0 : i32
    return %arg0, %c0_i32 : i32, i32
  }
}

</mosaic_0001>

<llo_original>
// kernel: tpu_custom_call.1
$region0: #{tpu_custom_call.1}
  #allocation0 [shape = 'u32[]', space=smem, size = 0x4, offset = 0x4, fixed_abs, tag = 'smem constant byte address 0x4 - core index']
  #allocation1 [shape = 'u32[144,128]{1,0:T(1,128)}', space=vmem, size = 0x12000, scoped, tag = 'internal scratch']
  %s0 = inlined_call_operand.hbm [shape: bf16[8,32], index: 0, kind: input, shape index: {}]
  %s1 = inlined_call_operand.hbm [shape: bf16[32,256], index: 1, kind: input, shape index: {}]
  %s2 = inlined_call_operand.vmem [shape: f32[1,256], index: 2, kind: input, shape index: {}]
  %s3 = inlined_call_operand.hbm [shape: bf16[128,128], index: 3, kind: input, shape index: {}]
  %s4 = inlined_call_operand.vmem [shape: f32[1,128], index: 4, kind: input, shape index: {}]
  %s5 = inlined_call_operand.hbm [shape: f32[8,128], index: 5, kind: output, shape index: {}]
  %s6 = sld [smem:[#allocation0]]
  $region42: #{tpu_custom_call.1} parent=0
    _
  %s8 = ssub.s32 1, %s6
  %s9 = scalar_select 0, %s8, %s6
  $region1: #{tpu_custom_call.1} parent=0
    #allocation2 [shape = 'u8[2048]{0}', space=vmem, size = 0x800, scoped, tag = 'input window, operand 0, single buffered']
    #allocation3 [shape = 's32[1]{0}', space=sflag, size = 0x4, scoped, tag = 'scoped memory for tpu_custom_call.1']
    #allocation4 [shape = 's32[1]{0}', space=sflag, size = 0x4, scoped, tag = 'scoped memory for tpu_custom_call.1']
    #allocation5 [shape = 'u8[16384]{0}', space=vmem, size = 0x4000, scoped, tag = 'input window, operand 1, single buffered']
    #allocation6 [shape = 's32[1]{0}', space=sflag, size = 0x4, scoped, tag = 'scoped memory for tpu_custom_call.1']
    #allocation7 [shape = 'u8[32768]{0}', space=vmem, size = 0x8000, scoped, tag = 'input window, operand 3, single buffered']
    #allocation8 [shape = 'u8[4096]{0}', space=vmem, size = 0x1000, scoped, tag = 'output window, operand 0, single buffered']
    %10 = vsyncpa [#allocation3], 0
    %11 = vsyncpa [#allocation6], 0
    %12 = vsyncpa [#allocation4], 0
    // Predicated region
    $region2: #{tpu_custom_call.1} parent=1 // pred_check
      _
    $region3: #{tpu_custom_call.1} parent=1 // pred_check_branch
      %14 = sbr.rel (0) target = $region5
    $region4: #{tpu_custom_call.1} parent=1 // pred_region
      %s16 = ssub.s32 64, 64
      %17 = vsyncadd [#allocation3], %s16
      %s19 = sshll.u32 [#allocation2], 4
      %s20 = int_to_ptr.vmem [resolvable:$true] %s19
      %22 = dma.hbm_to_vmem [thread:$0]  %s0, 64, %s20, [#allocation3]
    $region5: #{tpu_custom_call.1} parent=1 // pred_fallthru
      _
    // Predicated region
    $region6: #{tpu_custom_call.1} parent=1 // pred_check
      _
    $region7: #{tpu_custom_call.1} parent=1 // pred_check_branch
      %24 = sbr.rel (0) target = $region9
    $region8: #{tpu_custom_call.1} parent=1 // pred_region
      %s26 = ssub.s32 512, 512
      %27 = vsyncadd [#allocation6], %s26
      %s28 = sshll.u32 [#allocation5], 4
      %s29 = int_to_ptr.vmem [resolvable:$true] %s28
      %34 = dma.hbm_to_vmem [thread:$0]  %s1, 512, %s29, [#allocation6], 128, 128, 8
    $region9: #{tpu_custom_call.1} parent=1 // pred_fallthru
      _
    // Predicated region
    $region10: #{tpu_custom_call.1} parent=1 // pred_check
      _
    $region11: #{tpu_custom_call.1} parent=1 // pred_check_branch
      %36 = sbr.rel (0) target = $region13
    $region12: #{tpu_custom_call.1} parent=1 // pred_region
      _
    $region13: #{tpu_custom_call.1} parent=1 // pred_fallthru
      _
    // Predicated region
    $region14: #{tpu_custom_call.1} parent=1 // pred_check
      _
    $region15: #{tpu_custom_call.1} parent=1 // pred_check_branch
      %38 = sbr.rel (0) target = $region17
    $region16: #{tpu_custom_call.1} parent=1 // pred_region
      %s40 = ssub.s32 1024, 1024
      %41 = vsyncadd [#allocation6], %s40
      %s42 = sshll.u32 [#allocation7], 4
      %s43 = int_to_ptr.vmem [resolvable:$true] %s42
      %48 = dma.hbm_to_vmem [thread:$0]  %s3, 1024, %s43, [#allocation6], 64, 64, 4
    $region17: #{tpu_custom_call.1} parent=1 // pred_fallthru
      _
    // Predicated region
    $region18: #{tpu_custom_call.1} parent=1 // pred_check
      _
    $region19: #{tpu_custom_call.1} parent=1 // pred_check_branch
      %50 = sbr.rel (0) target = $region21
    $region20: #{tpu_custom_call.1} parent=1 // pred_region
      _
    $region21: #{tpu_custom_call.1} parent=1 // pred_fallthru
      _
    // Predicated region
    $region22: #{tpu_custom_call.1} parent=1 // pred_check
      _
    $region23: #{tpu_custom_call.1} parent=1 // pred_check_branch
      %52 = sbr.rel (0) target = $region25
    $region24: #{tpu_custom_call.1} parent=1 // pred_region
      %53 = dma.done [#allocation3], 64
    $region25: #{tpu_custom_call.1} parent=1 // pred_fallthru
      _
    // Predicated region
    $region26: #{tpu_custom_call.1} parent=1 // pred_check
      _
    $region27: #{tpu_custom_call.1} parent=1 // pred_check_branch
      %55 = sbr.rel (0) target = $region29
    $region28: #{tpu_custom_call.1} parent=1 // pred_region
      %56 = dma.done [#allocation6], 512
    $region29: #{tpu_custom_call.1} parent=1 // pred_fallthru
      _
    // Predicated region
    $region30: #{tpu_custom_call.1} parent=1 // pred_check
      _
    $region31: #{tpu_custom_call.1} parent=1 // pred_check_branch
      %58 = sbr.rel (0) target = $region33
    $region32: #{tpu_custom_call.1} parent=1 // pred_region
      %59 = dma.done [#allocation6], 1024
    $region33: #{tpu_custom_call.1} parent=1 // pred_fallthru
      _
    %v61 = vld [vmem:[#allocation2] sm:$0xf]
    %v62 = vld [vmem:[#allocation5] sm:$0xff]
    %v63 = vld [vmem:[#allocation5 + $0x8] sm:$0xff]
    %v64 = vld [vmem:[#allocation5 + $0x10] sm:$0xff]
    %v65 = vld [vmem:[#allocation5 + $0x18] sm:$0xff]
    %v66 = vld [vmem:[%s2] sm:$0x3]
    %v68 = vlaneseq
    %v69 = vshrl.u32 %v68, 7
    %v70 = vsub.s32 0, %v69
    %v71 = vrot.slane %v66, %v70
    %v72 = vlaneseq
    %v73 = vshrl.u32 %v72, 7
    %v74 = vsub.s32 1, %v73
    %v75 = vrot.slane %v66, %v74
    %v82 = vunpack.c.l.b16 %v62
    %v83 = vunpack.c.h.b16 %v62
    %v84 = vunpack.c.l.b16 %v63
    %v85 = vunpack.c.h.b16 %v63
    %v86 = vunpack.c.l.b16 %v64
    %v87 = vunpack.c.h.b16 %v64
    %v88 = vunpack.c.l.b16 %v65
    %v89 = vunpack.c.h.b16 %v65
    %v90 = vpack.c.b16 %v84, %v82
    %v91 = vpack.c.b16 %v85, %v83
    %v92 = vpack.c.b16 %v88, %v86
    %v93 = vpack.c.b16 %v89, %v87
    %vm98 = vcmask 261120
    %v100 = vsel %vm98, %v61, 0
    %102 = vmatprep.subr.bf16.mxu0 0
    %103 = vmatpush1.bf16.msra.mxu0 0
    %104 = vmatprep.subr.bf16.mxu0 0
    %105 = vmatpush1.bf16.msra.mxu0 0
    %106 = vmatprep.subr.bf16.mxu0 0
    %107 = vmatpush1.bf16.msra.mxu0 0
    %108 = vmatprep.subr.bf16.mxu0 0
    %109 = vmatpush1.bf16.msra.mxu0 0
    %110 = vmatprep.subr.bf16.mxu0 0
    %111 = vmatpush1.bf16.msra.mxu0 0
    %112 = vmatprep.subr.bf16.mxu0 0
    %113 = vmatpush1.bf16.msra.mxu0 0
    %114 = vmatprep.subr.bf16.mxu0 %v93
    %115 = vmatpush1.bf16.msra.mxu0 %v92
    %116 = vmatprep.subr.bf16.mxu0 %v91
    %117 = vmatpush1.bf16.msra.mxu0 %v90
    %118 = vmatprep.subr.bf16.mxu0 0
    %119 = vmatpush2.bf16.msra.mxu0 0
    %120 = vmatprep.subr.bf16.mxu0 0
    %121 = vmatpush2.bf16.msra.mxu0 0
    %122 = vmatprep.subr.bf16.mxu0 0
    %123 = vmatpush2.bf16.msra.mxu0 0
    %124 = vmatprep.subr.bf16.mxu0 0
    %125 = vmatpush2.bf16.msra.mxu0 0
    %126 = vmatprep.subr.bf16.mxu0 0
    %127 = vmatpush2.bf16.msra.mxu0 0
    %128 = vmatprep.subr.bf16.mxu0 0
    %129 = vmatpush2.bf16.msra.mxu0 0
    %130 = vmatprep.subr.bf16.mxu0 0
    %131 = vmatpush2.bf16.msra.mxu0 0
    %132 = vmatprep.subr.bf16.mxu0 0
    %133 = vmatpush2.bf16.msra.mxu0 0
    %134 = vmatprep.mubr.bf16.mxu0 0
    %135 = vmatmul.mubr.bf16.gmra.mxu0 %v100
    %v136 = vpop.f32.mrf.mxu0
    %v137 = vadd.f32 %v71, %v136
    %v138 = vpop.f32.mrf.mxu0
    %v139 = vadd.f32 %v75, %v138
    %v140 = vpop.f32.mrf.mxu0
    %v141 = vpop.f32.mrf.mxu0
    %142 = vdwg.mxu0
    %v143 = vsub.f32 0.0, %v139
    %v144 = vmul.f32 %v143, 1.442695
    %v145 = vpow.pop %v144
    %v146 = vadd.f32 %v145, 1.0
    %v147 = vrcp.pop %v146
    %v148 = vmul.f32 %v137, %v147
    %v149 = vmax.f32 %v148, 0.0
    %v150 = vpack.c.bf16 %v149, %v149
    %v151 = vld [vmem:[#allocation7] sm:$0xf]
    %v152 = vld [vmem:[#allocation7 + $0x4] sm:$0xf]
    %v153 = vld [vmem:[#allocation7 + $0x8] sm:$0xf]
    %v154 = vld [vmem:[#allocation7 + $0xc] sm:$0xf]
    %v155 = vld [vmem:[#allocation7 + $0x10] sm:$0xf]
    %v156 = vld [vmem:[#allocation7 + $0x14] sm:$0xf]
    %v157 = vld [vmem:[#allocation7 + $0x18] sm:$0xf]
    %v158 = vld [vmem:[#allocation7 + $0x1c] sm:$0xf]
    %v159 = vld [vmem:[#allocation7 + $0x20] sm:$0xf]
    %v160 = vld [vmem:[#allocation7 + $0x24] sm:$0xf]
    %v161 = vld [vmem:[#allocation7 + $0x28] sm:$0xf]
    %v162 = vld [vmem:[#allocation7 + $0x2c] sm:$0xf]
    %v163 = vld [vmem:[#allocation7 + $0x30] sm:$0xf]
    %v164 = vld [vmem:[#allocation7 + $0x34] sm:$0xf]
    %v165 = vld [vmem:[#allocation7 + $0x38] sm:$0xf]
    %v166 = vld [vmem:[#allocation7 + $0x3c] sm:$0xf]
    %v167 = vld [vmem:[%s4] sm:$0x1]
    %v169 = vlaneseq
    %v170 = vshrl.u32 %v169, 7
    %v171 = vsub.s32 0, %v170
    %v172 = vrot.slane %v167, %v171
    %v190 = vunpack.c.l.b16 %v151
    %v191 = vunpack.c.l.b16 %v152
    %v192 = vunpack.c.l.b16 %v153
    %v193 = vunpack.c.l.b16 %v154
    %v194 = vunpack.c.l.b16 %v155
    %v195 = vunpack.c.l.b16 %v156
    %v196 = vunpack.c.l.b16 %v157
    %v197 = vunpack.c.l.b16 %v158
    %v198 = vunpack.c.l.b16 %v159
    %v199 = vunpack.c.l.b16 %v160
    %v200 = vunpack.c.l.b16 %v161
    %v201 = vunpack.c.l.b16 %v162
    %v202 = vunpack.c.l.b16 %v163
    %v203 = vunpack.c.l.b16 %v164
    %v204 = vunpack.c.l.b16 %v165
    %v205 = vunpack.c.l.b16 %v166
    %v206 = vpack.c.b16 %v191, %v190
    %v207 = vpack.c.b16 %v193, %v192
    %v208 = vpack.c.b16 %v195, %v194
    %v209 = vpack.c.b16 %v197, %v196
    %v210 = vpack.c.b16 %v199, %v198
    %v211 = vpack.c.b16 %v201, %v200
    %v212 = vpack.c.b16 %v203, %v202
    %v213 = vpack.c.b16 %v205, %v204
    %222 = vmatprep.subr.bf16.mxu0 0
    %223 = vmatpush1.bf16.msra.mxu0 %v213
    %224 = vmatprep.subr.bf16.mxu0 0
    %225 = vmatpush1.bf16.msra.mxu0 %v212
    %226 = vmatprep.subr.bf16.mxu0 0
    %227 = vmatpush1.bf16.msra.mxu0 %v211
    %228 = vmatprep.subr.bf16.mxu0 0
    %229 = vmatpush1.bf16.msra.mxu0 %v210
    %230 = vmatprep.subr.bf16.mxu0 0
    %231 = vmatpush1.bf16.msra.mxu0 %v209
    %232 = vmatprep.subr.bf16.mxu0 0
    %233 = vmatpush1.bf16.msra.mxu0 %v208
    %234 = vmatprep.subr.bf16.mxu0 0
    %235 = vmatpush1.bf16.msra.mxu0 %v207
    %236 = vmatprep.subr.bf16.mxu0 0
    %237 = vmatpush1.bf16.msra.mxu0 %v206
    %238 = vmatprep.subr.bf16.mxu0 0
    %239 = vmatpush2.bf16.msra.mxu0 0
    %240 = vmatprep.subr.bf16.mxu0 0
    %241 = vmatpush2.bf16.msra.mxu0 0
    %242 = vmatprep.subr.bf16.mxu0 0
    %243 = vmatpush2.bf16.msra.mxu0 0
    %244 = vmatprep.subr.bf16.mxu0 0
    %245 = vmatpush2.bf16.msra.mxu0 0
    %246 = vmatprep.subr.bf16.mxu0 0
    %247 = vmatpush2.bf16.msra.mxu0 0
    %248 = vmatprep.subr.bf16.mxu0 0
    %249 = vmatpush2.bf16.msra.mxu0 0
    %250 = vmatprep.subr.bf16.mxu0 0
    %251 = vmatpush2.bf16.msra.mxu0 0
    %252 = vmatprep.subr.bf16.mxu0 0
    %253 = vmatpush2.bf16.msra.mxu0 0
    %254 = vmatprep.mubr.bf16.mxu0 0
    %255 = vmatmul.mubr.bf16.gmra.mxu0 %v150
    %v256 = vpop.f32.mrf.mxu0
    %v257 = vadd.f32 %v172, %v256
    %v258 = vpop.f32.mrf.mxu0
    %v259 = vpop.f32.mrf.mxu0
    %v260 = vpop.f32.mrf.mxu0
    %261 = vdwg.mxu0
    %262 = vmax.xlane.f32.xlu0 %v257
    %v263 = vpop.xlane.xlu0 %262
    %v264 = vsub.f32 %v257, %v263
    %v265 = vmul.f32 %v264, 1.442695
    %v266 = vpow.pop %v265
    %267 = vadd.xlane.f32.xlu0 %v266
    %v268 = vpop.xlane.xlu0 %267
    %v269 = vrcp.pop %v268
    %v270 = vmul.f32 %v266, %v269
    %271 = vst [vmem:[#allocation8] sm:$0xff] %v270
    // Predicated region
    $region34: #{tpu_custom_call.1} parent=1 // pred_check
      _
    $region35: #{tpu_custom_call.1} parent=1 // pred_check_branch
      %273 = sbr.rel (0) target = $region37
    $region36: #{tpu_custom_call.1} parent=1 // pred_region
      %s275 = ssub.s32 128, 128
      %276 = vsyncadd [#allocation4], %s275
      %s278 = sshll.u32 [#allocation8], 4
      %s279 = int_to_ptr.vmem [resolvable:$true] %s278
      %281 = dma.vmem_to_hbm [thread:$0]  %s279, 128, %s5, [#allocation4]
    $region37: #{tpu_custom_call.1} parent=1 // pred_fallthru
      _
    // Predicated region
    $region38: #{tpu_custom_call.1} parent=1 // pred_check
      _
    $region39: #{tpu_custom_call.1} parent=1 // pred_check_branch
      %283 = sbr.rel (0) target = $region41
    $region40: #{tpu_custom_call.1} parent=1 // pred_region
      %284 = dma.done [#allocation4], 128
    $region41: #{tpu_custom_call.1} parent=1 // pred_fallthru
      _
    %285 = vsyncpa [#allocation3], 1
    %286 = vsyncpa [#allocation6], 1
    %287 = vsyncpa [#allocation4], 1

// kernel: tpu_custom_call.1
$region0: #{tpu_custom_call.1}
  #allocation0 [shape = 'u32[]', space=smem, size = 0x4, offset = 0x4, fixed_abs, tag = 'smem constant byte address 0x4 - core index']
  #allocation1 [shape = 'u32[144,128]{1,0:T(1,128)}', space=vmem, size = 0x12000, scoped, tag = 'internal scratch']
  %s0 = inlined_call_operand.hbm [shape: bf16[8,32], index: 0, kind: input, shape index: {}]
  %s1 = inlined_call_operand.hbm [shape: bf16[32,256], index: 1, kind: input, shape index: {}]
  %s2 = inlined_call_operand.vmem [shape: f32[1,256], index: 2, kind: input, shape index: {}]
  %s3 = inlined_call_operand.hbm [shape: bf16[128,128], index: 3, kind: input, shape index: {}]
  %s4 = inlined_call_operand.vmem [shape: f32[1,128], index: 4, kind: input, shape index: {}]
  %s5 = inlined_call_operand.hbm [shape: f32[8,128], index: 5, kind: output, shape index: {}]
  %s6 = sld [smem:[#allocation0]]
  $region42: #{tpu_custom_call.1} parent=0
    _
  %s8 = ssub.s32 1, %s6
  %s9 = scalar_select 0, %s8, %s6
  $region1: #{tpu_custom_call.1} parent=0
    #allocation2 [shape = 'u8[2048]{0}', space=vmem, size = 0x800, scoped, tag = 'input window, operand 0, single buffered']
    #allocation3 [shape = 's32[1]{0}', space=sflag, size = 0x4, scoped, tag = 'scoped memory for tpu_custom_call.1']
    #allocation4 [shape = 's32[1]{0}', space=sflag, size = 0x4, scoped, tag = 'scoped memory for tpu_custom_call.1']
    #allocation5 [shape = 'u8[16384]{0}', space=vmem, size = 0x4000, scoped, tag = 'input window, operand 1, single buffered']
    #allocation6 [shape = 's32[1]{0}', space=sflag, size = 0x4, scoped, tag = 'scoped memory for tpu_custom_call.1']
    #allocation7 [shape = 'u8[32768]{0}', space=vmem, size = 0x8000, scoped, tag = 'input window, operand 3, single buffered']
    #allocation8 [shape = 'u8[4096]{0}', space=vmem, size = 0x1000, scoped, tag = 'output window, operand 0, single buffered']
    %10 = vsyncpa [#allocation3], 0
    %11 = vsyncpa [#allocation6], 0
    %12 = vsyncpa [#allocation4], 0
    // Predicated region
    $region2: #{tpu_custom_call.1} parent=1 // pred_check
      _
    $region3: #{tpu_custom_call.1} parent=1 // pred_check_branch
      %14 = sbr.rel (0) target = $region5
    $region4: #{tpu_custom_call.1} parent=1 // pred_region
      %s16 = ssub.s32 64, 64
      %17 = vsyncadd [#allocation3], %s16
      %s19 = sshll.u32 [#allocation2], 4
      %s20 = int_to_ptr.vmem [resolvable:$true] %s19
      %22 = dma.hbm_to_vmem [thread:$0]  %s0, 64, %s20, [#allocation3]
    $region5: #{tpu_custom_call.1} parent=1 // pred_fallthru
      _
    // Predicated region
    $region6: #{tpu_custom_call.1} parent=1 // pred_check
      _
    $region7: #{tpu_custom_call.1} parent=1 // pred_check_branch
      %24 = sbr.rel (0) target = $region9
    $region8: #{tpu_custom_call.1} parent=1 // pred_region
      %s26 = ssub.s32 512, 512
      %27 = vsyncadd [#allocation6], %s26
      %s28 = sshll.u32 [#allocation5], 4
      %s29 = int_to_ptr.vmem [resolvable:$true] %s28
      %34 = dma.hbm_to_vmem [thread:$0]  %s1, 512, %s29, [#allocation6], 128, 128, 8
    $region9: #{tpu_custom_call.1} parent=1 // pred_fallthru
      _
    // Predicated region
    $region10: #{tpu_custom_call.1} parent=1 // pred_check
      _
    $region11: #{tpu_custom_call.1} parent=1 // pred_check_branch
      %36 = sbr.rel (0) target = $region13
    $region12: #{tpu_custom_call.1} parent=1 // pred_region
      _
    $region13: #{tpu_custom_call.1} parent=1 // pred_fallthru
      _
    // Predicated region
    $region14: #{tpu_custom_call.1} parent=1 // pred_check
      _
    $region15: #{tpu_custom_call.1} parent=1 // pred_check_branch
      %38 = sbr.rel (0) target = $region17
    $region16: #{tpu_custom_call.1} parent=1 // pred_region
      %s40 = ssub.s32 1024, 1024
      %41 = vsyncadd [#allocation6], %s40
      %s42 = sshll.u32 [#allocation7], 4
      %s43 = int_to_ptr.vmem [resolvable:$true] %s42
      %48 = dma.hbm_to_vmem [thread:$0]  %s3, 1024, %s43, [#allocation6], 64, 64, 4
    $region17: #{tpu_custom_call.1} parent=1 // pred_fallthru
      _
    // Predicated region
    $region18: #{tpu_custom_call.1} parent=1 // pred_check
      _
    $region19: #{tpu_custom_call.1} parent=1 // pred_check_branch
      %50 = sbr.rel (0) target = $region21
    $region20: #{tpu_custom_call.1} parent=1 // pred_region
      _
    $region21: #{tpu_custom_call.1} parent=1 // pred_fallthru
      _
    // Predicated region
    $region22: #{tpu_custom_call.1} parent=1 // pred_check
      _
    $region23: #{tpu_custom_call.1} parent=1 // pred_check_branch
      %52 = sbr.rel (0) target = $region25
    $region24: #{tpu_custom_call.1} parent=1 // pred_region
      %53 = dma.done [#allocation3], 64
    $region25: #{tpu_custom_call.1} parent=1 // pred_fallthru
      _
    // Predicated region
    $region26: #{tpu_custom_call.1} parent=1 // pred_check
      _
    $region27: #{tpu_custom_call.1} parent=1 // pred_check_branch
      %55 = sbr.rel (0) target = $region29
    $region28: #{tpu_custom_call.1} parent=1 // pred_region
      %56 = dma.done [#allocation6], 512
    $region29: #{tpu_custom_call.1} parent=1 // pred_fallthru
      _
    // Predicated region
    $region30: #{tpu_custom_call.1} parent=1 // pred_check
      _
    $region31: #{tpu_custom_call.1} parent=1 // pred_check_branch
      %58 = sbr.rel (0) target = $region33
    $region32: #{tpu_custom_call.1} parent=1 // pred_region
      %59 = dma.done [#allocation6], 1024
    $region33: #{tpu_custom_call.1} parent=1 // pred_fallthru
      _
    %v61 = vld [vmem:[#allocation2] sm:$0xf]
    %v62 = vld [vmem:[#allocation5] sm:$0xff]
    %v63 = vld [vmem:[#allocation5 + $0x8] sm:$0xff]
    %v64 = vld [vmem:[#allocation5 + $0x10] sm:$0xff]
    %v65 = vld [vmem:[#allocation5 + $0x18] sm:$0xff]
    %v66 = vld [vmem:[%s2] sm:$0x3]
    %v68 = vlaneseq
    %v69 = vshrl.u32 %v68, 7
    %v70 = vsub.s32 0, %v69
    %v71 = vrot.slane %v66, %v70
    %v72 = vlaneseq
    %v73 = vshrl.u32 %v72, 7
    %v74 = vsub.s32 1, %v73
    %v75 = vrot.slane %v66, %v74
    %v82 = vunpack.c.l.b16 %v62
    %v83 = vunpack.c.h.b16 %v62
    %v84 = vunpack.c.l.b16 %v63
    %v85 = vunpack.c.h.b16 %v63
    %v86 = vunpack.c.l.b16 %v64
    %v87 = vunpack.c.h.b16 %v64
    %v88 = vunpack.c.l.b16 %v65
    %v89 = vunpack.c.h.b16 %v65
    %v90 = vpack.c.b16 %v84, %v82
    %v91 = vpack.c.b16 %v85, %v83
    %v92 = vpack.c.b16 %v88, %v86
    %v93 = vpack.c.b16 %v89, %v87
    %vm98 = vcmask 261120
    %v100 = vsel %vm98, %v61, 0
    %102 = vmatprep.subr.bf16.mxu0 0
    %103 = vmatpush1.bf16.msra.mxu0 0
    %104 = vmatprep.subr.bf16.mxu0 0
    %105 = vmatpush1.bf16.msra.mxu0 0
    %106 = vmatprep.subr.bf16.mxu0 0
    %107 = vmatpush1.bf16.msra.mxu0 0
    %108 = vmatprep.subr.bf16.mxu0 0
    %109 = vmatpush1.bf16.msra.mxu0 0
    %110 = vmatprep.subr.bf16.mxu0 0
    %111 = vmatpush1.bf16.msra.mxu0 0
    %112 = vmatprep.subr.bf16.mxu0 0
    %113 = vmatpush1.bf16.msra.mxu0 0
    %114 = vmatprep.subr.bf16.mxu0 %v93
    %115 = vmatpush1.bf16.msra.mxu0 %v92
    %116 = vmatprep.subr.bf16.mxu0 %v91
    %117 = vmatpush1.bf16.msra.mxu0 %v90
    %118 = vmatprep.subr.bf16.mxu0 0
    %119 = vmatpush2.bf16.msra.mxu0 0
    %120 = vmatprep.subr.bf16.mxu0 0
    %121 = vmatpush2.bf16.msra.mxu0 0
    %122 = vmatprep.subr.bf16.mxu0 0
    %123 = vmatpush2.bf16.msra.mxu0 0
    %124 = vmatprep.subr.bf16.mxu0 0
    %125 = vmatpush2.bf16.msra.mxu0 0
    %126 = vmatprep.subr.bf16.mxu0 0
    %127 = vmatpush2.bf16.msra.mxu0 0
    %128 = vmatprep.subr.bf16.mxu0 0
    %129 = vmatpush2.bf16.msra.mxu0 0
    %130 = vmatprep.subr.bf16.mxu0 0
    %131 = vmatpush2.bf16.msra.mxu0 0
    %132 = vmatprep.subr.bf16.mxu0 0
    %133 = vmatpush2.bf16.msra.mxu0 0
    %134 = vmatprep.mubr.bf16.mxu0 0
    %135 = vmatmul.mubr.bf16.gmra.mxu0 %v100
    %v136 = vpop.f32.mrf.mxu0
    %v137 = vadd.f32 %v71, %v136
    %v138 = vpop.f32.mrf.mxu0
    %v139 = vadd.f32 %v75, %v138
    %v140 = vpop.f32.mrf.mxu0
    %v141 = vpop.f32.mrf.mxu0
    %142 = vdwg.mxu0
    %v143 = vsub.f32 0.0, %v139
    %v144 = vmul.f32 %v143, 1.442695
    %v145 = vpow.pop %v144
    %v146 = vadd.f32 %v145, 1.0
    %v147 = vrcp.pop %v146
    %v148 = vmul.f32 %v137, %v147
    %v149 = vmax.f32 %v148, 0.0
    %v150 = vpack.c.bf16 %v149, %v149
    %v151 = vld [vmem:[#allocation7] sm:$0xf]
    %v152 = vld [vmem:[#allocation7 + $0x4] sm:$0xf]
    %v153 = vld [vmem:[#allocation7 + $0x8] sm:$0xf]
    %v154 = vld [vmem:[#allocation7 + $0xc] sm:$0xf]
    %v155 = vld [vmem:[#allocation7 + $0x10] sm:$0xf]
    %v156 = vld [vmem:[#allocation7 + $0x14] sm:$0xf]
    %v157 = vld [vmem:[#allocation7 + $0x18] sm:$0xf]
    %v158 = vld [vmem:[#allocation7 + $0x1c] sm:$0xf]
    %v159 = vld [vmem:[#allocation7 + $0x20] sm:$0xf]
    %v160 = vld [vmem:[#allocation7 + $0x24] sm:$0xf]
    %v161 = vld [vmem:[#allocation7 + $0x28] sm:$0xf]
    %v162 = vld [vmem:[#allocation7 + $0x2c] sm:$0xf]
    %v163 = vld [vmem:[#allocation7 + $0x30] sm:$0xf]
    %v164 = vld [vmem:[#allocation7 + $0x34] sm:$0xf]
    %v165 = vld [vmem:[#allocation7 + $0x38] sm:$0xf]
    %v166 = vld [vmem:[#allocation7 + $0x3c] sm:$0xf]
    %v167 = vld [vmem:[%s4] sm:$0x1]
    %v169 = vlaneseq
    %v170 = vshrl.u32 %v169, 7
    %v171 = vsub.s32 0, %v170
    %v172 = vrot.slane %v167, %v171
    %v190 = vunpack.c.l.b16 %v151
    %v191 = vunpack.c.l.b16 %v152
    %v192 = vunpack.c.l.b16 %v153
    %v193 = vunpack.c.l.b16 %v154
    %v194 = vunpack.c.l.b16 %v155
    %v195 = vunpack.c.l.b16 %v156
    %v196 = vunpack.c.l.b16 %v157
    %v197 = vunpack.c.l.b16 %v158
    %v198 = vunpack.c.l.b16 %v159
    %v199 = vunpack.c.l.b16 %v160
    %v200 = vunpack.c.l.b16 %v161
    %v201 = vunpack.c.l.b16 %v162
    %v202 = vunpack.c.l.b16 %v163
    %v203 = vunpack.c.l.b16 %v164
    %v204 = vunpack.c.l.b16 %v165
    %v205 = vunpack.c.l.b16 %v166
    %v206 = vpack.c.b16 %v191, %v190
    %v207 = vpack.c.b16 %v193, %v192
    %v208 = vpack.c.b16 %v195, %v194
    %v209 = vpack.c.b16 %v197, %v196
    %v210 = vpack.c.b16 %v199, %v198
    %v211 = vpack.c.b16 %v201, %v200
    %v212 = vpack.c.b16 %v203, %v202
    %v213 = vpack.c.b16 %v205, %v204
    %222 = vmatprep.subr.bf16.mxu0 0
    %223 = vmatpush1.bf16.msra.mxu0 %v213
    %224 = vmatprep.subr.bf16.mxu0 0
    %225 = vmatpush1.bf16.msra.mxu0 %v212
    %226 = vmatprep.subr.bf16.mxu0 0
    %227 = vmatpush1.bf16.msra.mxu0 %v211
    %228 = vmatprep.subr.bf16.mxu0 0
    %229 = vmatpush1.bf16.msra.mxu0 %v210
    %230 = vmatprep.subr.bf16.mxu0 0
    %231 = vmatpush1.bf16.msra.mxu0 %v209
    %232 = vmatprep.subr.bf16.mxu0 0
    %233 = vmatpush1.bf16.msra.mxu0 %v208
    %234 = vmatprep.subr.bf16.mxu0 0
    %235 = vmatpush1.bf16.msra.mxu0 %v207
    %236 = vmatprep.subr.bf16.mxu0 0
    %237 = vmatpush1.bf16.msra.mxu0 %v206
    %238 = vmatprep.subr.bf16.mxu0 0
    %239 = vmatpush2.bf16.msra.mxu0 0
    %240 = vmatprep.subr.bf16.mxu0 0
    %241 = vmatpush2.bf16.msra.mxu0 0
    %242 = vmatprep.subr.bf16.mxu0 0
    %243 = vmatpush2.bf16.msra.mxu0 0
    %244 = vmatprep.subr.bf16.mxu0 0
    %245 = vmatpush2.bf16.msra.mxu0 0
    %246 = vmatprep.subr.bf16.mxu0 0
    %247 = vmatpush2.bf16.msra.mxu0 0
    %248 = vmatprep.subr.bf16.mxu0 0
    %249 = vmatpush2.bf16.msra.mxu0 0
    %250 = vmatprep.subr.bf16.mxu0 0
    %251 = vmatpush2.bf16.msra.mxu0 0
    %252 = vmatprep.subr.bf16.mxu0 0
    %253 = vmatpush2.bf16.msra.mxu0 0
    %254 = vmatprep.mubr.bf16.mxu0 0
    %255 = vmatmul.mubr.bf16.gmra.mxu0 %v150
    %v256 = vpop.f32.mrf.mxu0
    %v257 = vadd.f32 %v172, %v256
    %v258 = vpop.f32.mrf.mxu0
    %v259 = vpop.f32.mrf.mxu0
    %v260 = vpop.f32.mrf.mxu0
    %261 = vdwg.mxu0
    %262 = vmax.xlane.f32.xlu0 %v257
    %v263 = vpop.xlane.xlu0 %262
    %v264 = vsub.f32 %v257, %v263
    %v265 = vmul.f32 %v264, 1.442695
    %v266 = vpow.pop %v265
    %267 = vadd.xlane.f32.xlu0 %v266
    %v268 = vpop.xlane.xlu0 %267
    %v269 = vrcp.pop %v268
    %v270 = vmul.f32 %v266, %v269
    %271 = vst [vmem:[#allocation8] sm:$0xff] %v270
    // Predicated region
    $region34: #{tpu_custom_call.1} parent=1 // pred_check
      _
    $region35: #{tpu_custom_call.1} parent=1 // pred_check_branch
      %273 = sbr.rel (0) target = $region37
    $region36: #{tpu_custom_call.1} parent=1 // pred_region
      %s275 = ssub.s32 128, 128
      %276 = vsyncadd [#allocation4], %s275
      %s278 = sshll.u32 [#allocation8], 4
      %s279 = int_to_ptr.vmem [resolvable:$true] %s278
      %281 = dma.vmem_to_hbm [thread:$0]  %s279, 128, %s5, [#allocation4]
    $region37: #{tpu_custom_call.1} parent=1 // pred_fallthru
      _
    // Predicated region
    $region38: #{tpu_custom_call.1} parent=1 // pred_check
      _
    $region39: #{tpu_custom_call.1} parent=1 // pred_check_branch
      %283 = sbr.rel (0) target = $region41
    $region40: #{tpu_custom_call.1} parent=1 // pred_region
      %284 = dma.done [#allocation4], 128
    $region41: #{tpu_custom_call.1} parent=1 // pred_fallthru
      _
    %285 = vsyncpa [#allocation3], 1
    %286 = vsyncpa [#allocation6], 1
    %287 = vsyncpa [#allocation4], 1

</llo_original>
